<compile_context>
chip_gen: v6e
topology: v6e:2x2x1
jax: 0.10.0
libtpu: 0.0.40
codegen_flags: <defaults>
</compile_context>

<pallas_src>
import jax
import jax.numpy as jnp
from jax.experimental import pallas as pl
from jax.experimental.pallas import tpu as pltpu

_LANE = 128


# --------------------------------------------------------------------------
# helpers
# --------------------------------------------------------------------------
def _resolve_size(size, total):
    """Resolve a single -1 entry in `size`, PyTorch-view style."""
    if isinstance(size, int):
        size = (size,)
    size = tuple(int(s) for s in size)
    if -1 in size:
        known = 1
        for s in size:
            if s != -1:
                known *= s
        assert known != 0 and total % known == 0, (
            "view size incompatible with number of elements")
        size = tuple(total // known if s == -1 else s for s in size)
    prod = 1
    for s in size:
        prod *= s
    assert prod == total, "view size incompatible with number of elements"
    return size


def _sublane_multiple(dtype):
    """Native packed-tile row multiple: 8 for 32-bit, 16 for bf16, 32 for int8/fp8."""
    bits = jnp.dtype(dtype).itemsize * 8
    if bits >= 32:
        return 8
    return (32 // bits) * 8


def _target_block_bytes():
    """Per-chip VMEM block budget for the staged copy path.

    v7x: 3.2 TB/s HBM -> 4 MiB blocks keep the copy in the 90%+ roofline
         regime; 4 MiB * 2 bufs * (in+out) = 16 MiB << 32 MiB scoped VMEM.
    v5e/v6e: 2 MiB blocks already amortize the ~0.35 us/step overhead and
         8 MiB working set fits even v5e's 16 MiB default scoped VMEM.
    """
    try:
        kind = jax.devices()[0].device_kind.lower()
    except Exception:
        return 2 * 1024 * 1024
    if "v7" in kind:
        return 4 * 1024 * 1024
    return 2 * 1024 * 1024


# --------------------------------------------------------------------------
# Path 1: direct HBM -> HBM DMA copy (default materialized-copy path)
# --------------------------------------------------------------------------
def _dma_copy_kernel(x_hbm_ref, o_hbm_ref, sem):
    cp = pltpu.make_async_copy(x_hbm_ref, o_hbm_ref, sem)
    cp.start()
    cp.wait()


def _pallas_copy_dma(x):
    """Whole-buffer HBM->HBM copy; no VMEM staging, no grid overhead."""
    nbytes = x.size * jnp.dtype(x.dtype).itemsize
    return pl.pallas_call(
        _dma_copy_kernel,
        out_shape=jax.ShapeDtypeStruct(x.shape, x.dtype),
        in_specs=[pl.BlockSpec(memory_space=pl.ANY)],
        out_specs=pl.BlockSpec(memory_space=pl.ANY),
        scratch_shapes=[pltpu.SemaphoreType.DMA],
        cost_estimate=pl.CostEstimate(
            flops=0, transcendentals=0, bytes_accessed=2 * nbytes),
    )(x)


# --------------------------------------------------------------------------
# Path 2: blocked VMEM-staged identity copy
# --------------------------------------------------------------------------
def _copy_kernel(x_ref, o_ref):
    # Identity copy of the current (block_rows, 128) tile.
    o_ref[...] = x_ref[...]


def _pallas_copy_2d(x2d, donate=False):
    """Single-pass lane-dense identity copy of a (rows, 128) array."""
    rows, lanes = x2d.shape
    itemsize = jnp.dtype(x2d.dtype).itemsize
    pack = _sublane_multiple(x2d.dtype)

    # dtype-aligned multi-MiB block target (unmasked full-width vld/vst).
    target_rows = max(pack, (_target_block_bytes() // (lanes * itemsize)))
    target_rows = max(pack, (target_rows // pack) * pack)

    if rows > 2 * pack:
        # Guarantee >= ~4 grid steps so double-buffering actually engages:
        # write-back of block i overlaps input prefetch of block i+1.
        quarter = max(pack, (rows // (4 * pack)) * pack)
        block_rows = min(target_rows, quarter)
    else:
        block_rows = rows  # tiny input: single full-dim block (always legal)

    grid = (pl.cdiv(rows, block_rows),)  # partial last block handled by masking

    kwargs = {}
    if donate:
        # Only alias when the caller genuinely donates the input; otherwise XLA
        # inserts a defensive full copy of x before the kernel (2x HBM traffic).
        kwargs["input_output_aliases"] = {0: 0}

    # TODO(synk): on v7x, split the grid across both TensorCores explicitly
    # (pltpu.CORE_PARALLEL semantics or a core_map over
    # create_tensorcore_mesh); plain "parallel" semantics alone does not
    # guarantee both cores stream DMAs concurrently.
    return pl.pallas_call(
        _copy_kernel,
        out_shape=jax.ShapeDtypeStruct((rows, lanes), x2d.dtype),
        grid=grid,
        in_specs=[pl.BlockSpec((block_rows, lanes), lambda i: (i, 0))],
        out_specs=pl.BlockSpec((block_rows, lanes), lambda i: (i, 0)),
        compiler_params=pltpu.CompilerParams(
            dimension_semantics=("parallel",),
        ),
        cost_estimate=pl.CostEstimate(
            flops=0, transcendentals=0,
            bytes_accessed=2 * rows * lanes * itemsize),
        **kwargs,
    )(x2d)


# --------------------------------------------------------------------------
# public API
# --------------------------------------------------------------------------
def pallas_view(x, size, mode="dma", donate_input=False):
    """torch.Tensor.view(size) equivalent.

    mode:
      "reshape": metadata-only (exact equivalent of a contiguous .view()).
      "dma":     materialized copy via a single HBM->HBM DMA (default).
      "vmem":    materialized copy via the blocked VMEM-staged kernel.
    """
    total = x.size
    out_size = _resolve_size(size, total)

    if mode == "reshape" or total == 0:
        return jnp.reshape(x, out_size)

    if mode == "vmem" and total % _LANE == 0:
        # Row-major flatten straight into a lane-dense (rows, 128) layout;
        # no padding, no post-kernel slicing.
        x2d = x.reshape(total // _LANE, _LANE)
        out2d = _pallas_copy_2d(x2d, donate=donate_input)
        return out2d.reshape(out_size)

    # Default (and fallback for non-128-multiple lengths): HBM->HBM DMA copy.
    x_out_shaped = jnp.reshape(x, out_size)  # metadata-only row-major reshape
    return _pallas_copy_dma(x_out_shaped)


class View:
    """JAX/Pallas equivalent of the PyTorch View module."""

    def __init__(self, size, mode="dma", donate_input=False):
        self.size = size
        self.mode = mode
        self.donate_input = donate_input

    def __call__(self, tensor):
        return pallas_view(tensor, self.size, self.mode, self.donate_input)


if __name__ == "__main__":
    key = jax.random.PRNGKey(0)
    k0, k1 = jax.random.split(key)

    # Small NCHW input: batch=2, channels=4, spatial=16x16 -> 2048 elements.
    x = jax.random.normal(k0, (2, 4, 16, 16), dtype=jnp.float32)
    ref = jnp.reshape(x, (2, 1024))

    # 1) default path: HBM->HBM DMA copy.
    out_dma = jax.block_until_ready(View((2, -1))(x))
    assert out_dma.shape == (2, 1024) and out_dma.dtype == x.dtype
    assert bool(jnp.all(out_dma == ref)), "DMA view mismatch"

    # 2) blocked VMEM-staged copy kernel path.
    out_vmem = jax.block_until_ready(View((2, -1), mode="vmem")(x))
    assert bool(jnp.all(out_vmem == ref)), "VMEM view mismatch"

    # 3) zero-copy (metadata-only) path.
    out_meta = View((2, -1), mode="reshape")(x)
    assert bool(jnp.all(out_meta == ref)), "reshape view mismatch"

    # 4) multi-step grid + masked partial last block on the VMEM path:
    #    (4, 640) -> 2560 elements = 20 lane-rows, block_rows=8 -> grid of 3.
    x2 = jax.random.normal(k1, (4, 640), dtype=jnp.float32)
    ref2 = jnp.reshape(x2, (20, 128))
    out2 = jax.block_until_ready(View((20, 128), mode="vmem")(x2))
    assert bool(jnp.all(out2 == ref2)), "masked-block view mismatch"

    print("KERNEL_OK")
</pallas_src>

<mosaic_0001>
module attributes {stable_mosaic.version = 11 : i64} {
  func.func @_dma_copy_kernel(%arg0: memref<2x1024xf32, #tpu.memory_space<any>>, %arg1: memref<2x1024xf32, #tpu.memory_space<any>>, %arg2: memref<!tpu.dma_semaphore, #tpu.memory_space<semaphore_mem>>) attributes {dimension_semantics = [], scalar_prefetch = 0 : i64, scratch_operands = 1 : i64, tpu.core_type = #tpu.core_type<tc>} {
    tpu.enqueue_dma source(%arg0 : memref<2x1024xf32, #tpu.memory_space<any>>) target(%arg1 : memref<2x1024xf32, #tpu.memory_space<any>>) target_semaphore(%arg2 : memref<!tpu.dma_semaphore, #tpu.memory_space<semaphore_mem>>)
    tpu.wait_dma2 semaphore(%arg2 : memref<!tpu.dma_semaphore, #tpu.memory_space<semaphore_mem>>) src(%arg0 : memref<2x1024xf32, #tpu.memory_space<any>>) dst(%arg1 : memref<2x1024xf32, #tpu.memory_space<any>>)
    return
  }
}

</mosaic_0001>

<llo_original>
// kernel: tpu_custom_call.1
$region0: #{tpu_custom_call.1}
  #allocation0 [shape = 'u32[]', space=smem, size = 0x4, offset = 0x4, fixed_abs, tag = 'smem constant byte address 0x4 - core index']
  #allocation1 [shape = 'u32[144,128]{1,0:T(1,128)}', space=vmem, size = 0x12000, scoped, tag = 'internal scratch']
  #allocation2 [shape = 's32[1]{0}', space=sflag, size = 0x4, scoped, tag = 'scratch operand']
  #allocation3 [shape = 's32[]', space=sflag, size = 0x4, offset = 0, fixed_abs, tag = 'sflag constant byte address 0x0 - dummy sync flag']
  #allocation4 [shape = 'u32[0]{0}', space=smem, size = 0, offset = 0, fixed_abs, tag = 'smem constant byte address 0x0 - null']
  %s0 = inlined_call_operand.hbm [shape: f32[2,1024], index: 0, kind: input, shape index: {}]
  %s1 = inlined_call_operand.hbm [shape: f32[2,1024], index: 1, kind: output, shape index: {}]
  %s2 = sld [smem:[#allocation0]]
  $region2: #{tpu_custom_call.1} parent=0
    _
  %s4 = ssub.s32 1, %s2
  %s5 = scalar_select 0, %s4, %s2
  %s7 = sshll.u32 1, 14
  %s8 = sxor.u32 4294967295, %s7
  %12 = dma.general %s0, 256, %s1, [#allocation2], 131072, [#allocation4], 0, 0
  %s13 = smul.u32 2, 1
  %s14 = smul.u32 %s13, 8
  %s15 = sshll.u32 %s14, 4
  %16 = dma.done [#allocation2], %s15
  %17 = vsyncmov [#allocation2]
  %s18 = vpop.sfrf %17
  %p19 = scmp.eq.s32.totalorder %s18, 0
  %p20 = pneg %p19
  %22 = shalt.err (%p20)

</llo_original>
